<compile_context>
chip_gen: v6e
topology: v6e:2x2x1
jax: 0.10.0
libtpu: 0.0.40
codegen_flags: <defaults>
</compile_context>

<pallas_src>
import jax
import jax.numpy as jnp
from jax.experimental import pallas as pl
from jax.experimental.pallas import tpu as pltpu


def _cdiv(a, b):
    return (a + b - 1) // b


def _fsnet_kernel(fd_ref, w_ref, dft_ref, out_ref):
    """One grid block = one balanced tile of STFT frames.

    fd_ref : (TM, n_fft) bf16  difference-signal frames (x - y), un-windowed
    w_ref  : (TM, 1)     f32   per-frame L1 weights (0 on padded rows)
    dft_ref: (n_fft, KP) bf16  packed hann-windowed [cos | -sin] rDFT matrix
    out_ref: (1, 1, 128) f32   lane-dense per-block spectral partial
    """
    # Single MXU matmul: real parts in the cos columns, imag parts in the sin
    # columns; bf16 operands, f32 accumulation.
    d_ri = jnp.dot(fd_ref[...], dft_ref[...],
                   preferred_element_type=jnp.float32)          # (TM, KP) f32
    # Per-row weights realize the two chunk-wise L1 means of torch.chunk(dim=2)
    # (padded rows / padded columns carry weight 0 / value 0).
    spec_partial = jnp.sum(jnp.abs(d_ri) * w_ref[...])
    out_ref[...] = jnp.full(out_ref.shape, spec_partial, dtype=jnp.float32)


def fsnet_loss(x, y, *, alpha=0.4, fft_size=512, shift_size=100, row_tile=None):
    """x: predicted (B, T), y: clean (B, T). Returns scalar FSNetLoss."""
    B, T = x.shape
    assert y.shape == (B, T)
    x = x.astype(jnp.float32)
    y = y.astype(jnp.float32)
    d = x - y  # both loss terms depend only on the difference (STFT is linear)

    # ---- time-domain MSE: trivial reduce, fused by XLA with (x - y) ---------
    mse = jnp.mean(d * d)

    # ---- STFT framing of the difference signal (torch.stft center=True) -----
    pad = fft_size // 2
    assert T > pad, "signal too short for reflect padding"
    d_pad = jnp.pad(d, ((0, 0), (pad, pad)), mode="reflect")
    n_frames = 1 + (d_pad.shape[1] - fft_size) // shift_size
    assert n_frames >= 2, "need at least two STFT frames (torch.chunk of 2)"
    R = B * n_frames
    n_bins = fft_size // 2 + 1

    # ---- balanced row tiling: num_blocks first, then tile size --------------
    if row_tile is None:
        num_blocks = max(2, _cdiv(R, 1024))
        num_blocks += num_blocks % 2       # even -> balanced across 2 TCs (v7x)
        row_tile = 8 * _cdiv(_cdiv(R, num_blocks), 8)
    else:
        assert row_tile % 8 == 0
        num_blocks = _cdiv(R, row_tile)
    r_pad = num_blocks * row_tile

    # ---- gather frames directly at the padded row count (single HBM copy) ---
    # TODO(synk): for very long signals the framing could move inside the
    # kernel (manual DMA of each tile's contiguous hop-strided window) to avoid
    # materialising the 5.12x-expanded frames array; hop=100 is not lane
    # aligned, so it is left wrapper-side here.
    rid = jnp.minimum(jnp.arange(r_pad), R - 1)        # clamp dummy rows
    b_idx = rid // n_frames
    start = (rid % n_frames) * shift_size
    cols = start[:, None] + jnp.arange(fft_size)[None, :]
    frames = d_pad[b_idx[:, None], cols].astype(jnp.bfloat16)   # (r_pad, n_fft)

    # ---- per-frame weights implementing the two chunk-wise L1 means ---------
    f1 = (n_frames + 1) // 2               # torch.chunk(., 2, dim=2) chunk sizes
    f2 = n_frames - f1
    w_frame = jnp.where(jnp.arange(n_frames) < f1,
                        1.0 / (B * n_bins * 2 * f1),
                        1.0 / (B * n_bins * 2 * f2)).astype(jnp.float32)
    w_rows = jnp.where(jnp.arange(r_pad) < R, w_frame[rid % n_frames], 0.0)
    w_rows = w_rows.reshape(r_pad, 1).astype(jnp.float32)

    # ---- packed hann-windowed rDFT matrix: [cos k=0..K | -sin k=1..K-1] -----
    # Exact packing: the sin columns for k=0 (DC) and k=fft/2 (Nyquist) are
    # identically zero, so omitting them does not change the L1 sum.  This
    # invariant requires an even fft_size.
    assert fft_size % 2 == 0
    n = jnp.arange(fft_size, dtype=jnp.float32)
    k = jnp.arange(n_bins, dtype=jnp.float32)
    win = 0.5 - 0.5 * jnp.cos(2.0 * jnp.pi * n / fft_size)  # periodic hann
    ang = 2.0 * jnp.pi * n[:, None] * k[None, :] / fft_size
    cos_m = win[:, None] * jnp.cos(ang)                     # (n_fft, n_bins)
    sin_m = -win[:, None] * jnp.sin(ang[:, 1:n_bins - 1])   # (n_fft, n_bins-2)
    dft = jnp.concatenate([cos_m, sin_m], axis=1)           # (n_fft, 2*n_bins-2)
    kp = 128 * _cdiv(dft.shape[1], 128)                     # == fft_size for 512
    dft = jnp.pad(dft, ((0, 0), (0, kp - dft.shape[1]))).astype(jnp.bfloat16)

    # Explicit VMEM budget only needed for very large (user-chosen) tiles; the
    # default heuristic stays well under the 32 MiB scoped limit (v7x: 64 MiB).
    vmem_limit = None
    if row_tile >= 2048:
        vmem_limit = min(64 * 1024 * 1024,
                         int(4 * (row_tile * fft_size * 2       # frames x2 bufs
                                  + fft_size * kp * 2           # dft   x2 bufs
                                  + row_tile * kp * 4)))        # f32 result

    partials = pl.pallas_call(
        _fsnet_kernel,
        out_shape=jax.ShapeDtypeStruct((num_blocks, 1, 128), jnp.float32),
        grid_spec=pltpu.PrefetchScalarGridSpec(
            num_scalar_prefetch=0,
            grid=(num_blocks,),
            in_specs=[
                pl.BlockSpec((row_tile, fft_size), lambda i: (i, 0)),
                pl.BlockSpec((row_tile, 1), lambda i: (i, 0)),
                pl.BlockSpec((fft_size, kp), lambda i: (0, 0)),   # resident RHS
            ],
            out_specs=pl.BlockSpec((1, 1, 128), lambda i: (i, 0, 0)),
        ),
        compiler_params=pltpu.CompilerParams(
            dimension_semantics=("parallel",),
            vmem_limit_bytes=vmem_limit),
    )(frames, w_rows, dft)

    # Tiny scalar epilogue in plain JAX.
    spec_sum = jnp.sum(partials[:, 0, 0])
    return alpha * mse + (1.0 - alpha) * spec_sum


def _reference_loss(x, y, alpha=0.4, fft_size=512, shift_size=100):
    """Pure-JAX reference of FSNetLoss.forward (torch.stft via jnp.fft.rfft)."""
    x = x.astype(jnp.float32)
    y = y.astype(jnp.float32)
    mse = jnp.mean((y - x) ** 2)

    pad = fft_size // 2
    n = jnp.arange(fft_size, dtype=jnp.float32)
    win = 0.5 - 0.5 * jnp.cos(2.0 * jnp.pi * n / fft_size)

    def stft(sig):
        sp = jnp.pad(sig, ((0, 0), (pad, pad)), mode="reflect")
        nf = 1 + (sp.shape[1] - fft_size) // shift_size
        fidx = (jnp.arange(nf)[:, None] * shift_size
                + jnp.arange(fft_size)[None, :])
        fr = sp[:, fidx] * win[None, None, :]
        spec = jnp.fft.rfft(fr, axis=-1)                     # (B, F, bins)
        ri = jnp.stack([spec.real, spec.imag], axis=-1)      # (B, F, bins, 2)
        return jnp.transpose(ri, (0, 2, 1, 3))               # (B, bins, F, 2)

    sx, sy = stft(x), stft(y)
    nf = sx.shape[2]
    f1 = (nf + 1) // 2
    spectral = (jnp.mean(jnp.abs(sy[:, :, :f1] - sx[:, :, :f1]))
                + jnp.mean(jnp.abs(sy[:, :, f1:] - sx[:, :, f1:])))
    return alpha * mse + (1.0 - alpha) * spectral


if __name__ == "__main__":
    key = jax.random.PRNGKey(0)
    kx, ky = jax.random.split(key)
    B, T = 2, 4096  # (B, T) predicted / clean waveforms
    y = jax.random.normal(ky, (B, T), dtype=jnp.float32)            # clean
    x = y + 0.3 * jax.random.normal(kx, (B, T), dtype=jnp.float32)  # estimate

    loss = jax.block_until_ready(jax.jit(fsnet_loss)(x, y))
    ref = jax.block_until_ready(_reference_loss(x, y, alpha=0.4))

    assert bool(jnp.isfinite(loss)), loss
    # bf16 matmul operands (f32 accumulation) -> slightly looser tolerance than
    # the all-f32 reference.
    assert jnp.allclose(loss, ref, rtol=5e-3, atol=1e-3), (loss, ref)

    print("KERNEL_OK")
</pallas_src>

<mosaic_0001>
module attributes {stable_mosaic.version = 11 : i64} {
  func.func @_fsnet_kernel(%arg0: i32, %arg1: memref<48x512xbf16, #tpu.memory_space<vmem>>, %arg2: memref<48x1xf32, #tpu.memory_space<vmem>>, %arg3: memref<512x512xbf16, #tpu.memory_space<vmem>>, %arg4: memref<1x1x128xf32, #tpu.memory_space<vmem>>) attributes {dimension_semantics = [#tpu.dimension_semantics<parallel>], iteration_bounds = array<i64: 2>, scalar_prefetch = 0 : i64, scratch_operands = 0 : i64, tpu.core_type = #tpu.core_type<tc>, window_params = [{transform_indices = @transform_0, window_bounds = array<i64: 48, 512>}, {transform_indices = @transform_1, window_bounds = array<i64: 48, 1>}, {pipeline_mode = #tpu.pipeline_mode<synchronous>, transform_indices = @transform_2, window_bounds = array<i64: 512, 512>}, {transform_indices = @transform_3, window_bounds = array<i64: 1, 1, 128>}]} {
    %c0 = arith.constant 0 : index
    %c0_0 = arith.constant 0 : index
    %0 = vector.load %arg1[%c0, %c0_0] : memref<48x512xbf16, #tpu.memory_space<vmem>>, vector<48x512xbf16>
    %c0_1 = arith.constant 0 : index
    %c0_2 = arith.constant 0 : index
    %1 = vector.load %arg3[%c0_1, %c0_2] : memref<512x512xbf16, #tpu.memory_space<vmem>>, vector<512x512xbf16>
    %cst = arith.constant dense<0.000000e+00> : vector<48x512xf32>
    %2 = tpu.matmul %0, %1, %cst {dimension_numbers = #tpu.dot_dimension_numbers<[1], [0], [0], [1], [0, 0, 1, 1], [], []>} : vector<48x512xbf16>, vector<512x512xbf16>, vector<48x512xf32> -> vector<48x512xf32>
    %3 = math.absf %2 : vector<48x512xf32>
    %c0_3 = arith.constant 0 : index
    %c0_4 = arith.constant 0 : index
    %4 = vector.load %arg2[%c0_3, %c0_4] : memref<48x1xf32, #tpu.memory_space<vmem>>, vector<48x1xf32>
    %5 = vector.broadcast %4 : vector<48x1xf32> to vector<48x512xf32>
    %6 = arith.mulf %3, %5 : vector<48x512xf32>
    %7 = vector.shape_cast %6 : vector<48x512xf32> to vector<1x48x512xf32>
    %cst_5 = arith.constant dense<0.000000e+00> : vector<1xf32>
    %8 = vector.multi_reduction <add>, %7, %cst_5 [1, 2] : vector<1x48x512xf32> to vector<1xf32>
    %9 = vector.shape_cast %8 : vector<1xf32> to vector<1x1x1xf32>
    %10 = vector.extract %9[0, 0, 0] : f32 from vector<1x1x1xf32>
    %11 = vector.broadcast %10 : f32 to vector<1x1x128xf32>
    %c0_6 = arith.constant 0 : index
    %c0_7 = arith.constant 0 : index
    %c0_8 = arith.constant 0 : index
    %12 = vector.load %arg4[%c0_6, %c0_7, %c0_8] : memref<1x1x128xf32, #tpu.memory_space<vmem>>, vector<1x1x128xf32>
    tpu.vector_store %arg4[%c0_6, %c0_7, %c0_8], %11 {strides = array<i32>} : memref<1x1x128xf32, #tpu.memory_space<vmem>>, vector<1x1x128xf32>,
    return
  }
  func.func @transform_0(%arg0: i32) -> (i32, i32) {
    %c0_i32 = arith.constant 0 : i32
    %c0_i32_0 = arith.constant 0 : i32
    return %arg0, %c0_i32 : i32, i32
  }
  func.func @transform_1(%arg0: i32) -> (i32, i32) {
    %c0_i32 = arith.constant 0 : i32
    %c0_i32_0 = arith.constant 0 : i32
    return %arg0, %c0_i32 : i32, i32
  }
  func.func @transform_2(%arg0: i32) -> (i32, i32) {
    %c0_i32 = arith.constant 0 : i32
    %c0_i32_0 = arith.constant 0 : i32
    %c0_i32_1 = arith.constant 0 : i32
    return %c0_i32, %c0_i32_0 : i32, i32
  }
  func.func @transform_3(%arg0: i32) -> (i32, i32, i32) {
    %c0_i32 = arith.constant 0 : i32
    %c0_i32_0 = arith.constant 0 : i32
    %c0_i32_1 = arith.constant 0 : i32
    return %arg0, %c0_i32, %c0_i32_0 : i32, i32, i32
  }
}

</mosaic_0001>

<llo_original>
// kernel: fsnet_loss.1
$region0: #{fsnet_loss.1}
  #allocation0 [shape = 'u32[]', space=smem, size = 0x4, offset = 0x4, fixed_abs, tag = 'smem constant byte address 0x4 - core index']
  #allocation1 [shape = 'u32[144,128]{1,0:T(1,128)}', space=vmem, size = 0x12000, scoped, tag = 'internal scratch']
  %s0 = inlined_call_operand.vmem [shape: bf16[96,512], index: 0, kind: input, shape index: {}]
  %s1 = inlined_call_operand.vmem [shape: f32[96,1], index: 1, kind: input, shape index: {}]
  %s2 = inlined_call_operand.vmem [shape: bf16[512,512], index: 2, kind: input, shape index: {}]
  %s3 = inlined_call_operand.vmem [shape: f32[2,1,128], index: 3, kind: output, shape index: {}]
  %s4 = sld [smem:[#allocation0]]
  $region45: #{fsnet_loss.1} parent=0
    _
  %s6 = ssub.s32 1, %s4
  %s7 = scalar_select 0, %s6, %s4
  loop: start=0, step=1, limit=4
  $region2: #{fsnet_loss.1} parent=0 // loop_pre_header
    _
  $region3: #{fsnet_loss.1} parent=0 // loop_header
    %s9 = sphi 0, %s13
    %p10 = scmp.ge.s32.totalorder %s9, 4
    %s19 = sphi 0, %s21
    %s22 = sphi 0, %s19
    %s23 = sphi 0, %s22
    %s39 = sphi 0, %s23
    %s45 = sphi 0, %s47
    %s48 = sphi 0, %s45
    %s49 = sphi 0, %s48
    %s65 = sphi 0, %s49
    %s69 = sphi 0, %s69
    %s71 = sphi 0, %s69
    %s72 = sphi 0, %s71
    %s86 = sphi 0, %s72
    %s92 = sphi 0, %s94
    %s95 = sphi 0, %s92
    %s96 = sphi 0, %s95
    %s112 = sphi 0, %s96
  $region4: #{fsnet_loss.1} parent=0 // loop_header_branch
    %12 = sbr.rel (%p10) target = $region8
  $region5: #{fsnet_loss.1} parent=0 // loop_body
    %s14 = ssub.s32 %s9, 1
    %s15 = ssub.s32 %s9, 2
    %s16 = sadd.s32 %s9, 1
    %s17 = ssub.s32 %s9, %s16
    %p18 = scmp.eq.s32.totalorder %s17, 0
    %s20 = sadd.s32 %s19, 1
    %s21 = scalar_select %p18, %s19, %s20
    %p24 = pneg %p18
    %p25 = scmp.eq.s32.totalorder %s9, 1
    %p26 = por %p24, %p25
    %p27 = scmp.ne.s32.totalorder %s19, %s22
    %p28 = scmp.eq.s32.totalorder %s9, 0
    %p29 = por %p27, %p28
    %p30 = scmp.ne.s32.totalorder %s19, %s22
    %p31 = scmp.eq.s32.totalorder %s14, 1
    %p32 = por %p30, %p31
    %p33 = scmp.ne.s32.totalorder %s22, %s23
    %p34 = scmp.eq.s32.totalorder %s14, 0
    %p35 = por %p33, %p34
    %p36 = scmp.ne.s32.totalorder %s22, %s23
    %p37 = scmp.eq.s32.totalorder %s15, 1
    %p38 = por %p36, %p37
    %p40 = scmp.ne.s32.totalorder %s23, %s39
    %p41 = scmp.eq.s32.totalorder %s15, 0
    %p42 = por %p40, %p41
    %s43 = ssub.s32 %s9, %s16
    %p44 = scmp.eq.s32.totalorder %s43, 0
    %s46 = sadd.s32 %s45, 1
    %s47 = scalar_select %p44, %s45, %s46
    %p50 = pneg %p44
    %p51 = scmp.eq.s32.totalorder %s9, 1
    %p52 = por %p50, %p51
    %p53 = scmp.ne.s32.totalorder %s45, %s48
    %p54 = scmp.eq.s32.totalorder %s9, 0
    %p55 = por %p53, %p54
    %p56 = scmp.ne.s32.totalorder %s45, %s48
    %p57 = scmp.eq.s32.totalorder %s14, 1
    %p58 = por %p56, %p57
    %p59 = scmp.ne.s32.totalorder %s48, %s49
    %p60 = scmp.eq.s32.totalorder %s14, 0
    %p61 = por %p59, %p60
    %p62 = scmp.ne.s32.totalorder %s48, %s49
    %p63 = scmp.eq.s32.totalorder %s15, 1
    %p64 = por %p62, %p63
    %p66 = scmp.ne.s32.totalorder %s49, %s65
    %p67 = scmp.eq.s32.totalorder %s15, 0
    %p68 = por %p66, %p67
    %s70 = sadd.s32 %s69, 1
    %p73 = scmp.eq.s32.totalorder %s9, 1
    %p74 = scmp.ne.s32.totalorder %s69, %s71
    %p75 = scmp.eq.s32.totalorder %s9, 0
    %p76 = por %p74, %p75
    %p77 = scmp.ne.s32.totalorder %s69, %s71
    %p78 = scmp.eq.s32.totalorder %s14, 1
    %p79 = por %p77, %p78
    %p80 = scmp.ne.s32.totalorder %s71, %s72
    %p81 = scmp.eq.s32.totalorder %s14, 0
    %p82 = por %p80, %p81
    %p83 = scmp.ne.s32.totalorder %s71, %s72
    %p84 = scmp.eq.s32.totalorder %s15, 1
    %p85 = por %p83, %p84
    %p87 = scmp.ne.s32.totalorder %s72, %s86
    %p88 = scmp.eq.s32.totalorder %s15, 0
    %p89 = por %p87, %p88
    %s90 = ssub.s32 %s9, %s16
    %p91 = scmp.eq.s32.totalorder %s90, 0
    %s93 = sadd.s32 %s92, 1
    %s94 = scalar_select %p91, %s92, %s93
    %p97 = pneg %p91
    %p98 = scmp.eq.s32.totalorder %s9, 1
    %p99 = por %p97, %p98
    %p100 = scmp.ne.s32.totalorder %s92, %s95
    %p101 = scmp.eq.s32.totalorder %s9, 0
    %p102 = por %p100, %p101
    %p103 = scmp.ne.s32.totalorder %s92, %s95
    %p104 = scmp.eq.s32.totalorder %s14, 1
    %p105 = por %p103, %p104
    %p106 = scmp.ne.s32.totalorder %s95, %s96
    %p107 = scmp.eq.s32.totalorder %s14, 0
    %p108 = por %p106, %p107
    %p109 = scmp.ne.s32.totalorder %s95, %s96
    %p110 = scmp.eq.s32.totalorder %s15, 1
    %p111 = por %p109, %p110
    %p113 = scmp.ne.s32.totalorder %s96, %s112
    %p114 = scmp.eq.s32.totalorder %s15, 0
    %p115 = por %p113, %p114
    %p116 = scmp.le.s32.totalorder 1, %s9
    %p117 = scmp.lt.s32.totalorder %s9, 3
    %p118 = pnand %p116, %p117
    %p119 = pneg %p118
    // Predicated region
    $region9: #{fsnet_loss.1} parent=5 // pred_check
      _
    $region10: #{fsnet_loss.1} parent=5 // pred_check_branch
      %121 = sbr.rel (%p118) target = $region12
    $region11: #{fsnet_loss.1} parent=5 // pred_region
      %s122 = ssub.s32 %s9, 1
      // Predicated region
      $region13: #{fsnet_loss.1} parent=11 // pred_check
        %p123 = pneg %p82
      $region14: #{fsnet_loss.1} parent=11 // pred_check_branch
        %125 = sbr.rel (%p123) target = $region16
      $region15: #{fsnet_loss.1} parent=11 // pred_region
        _
      $region16: #{fsnet_loss.1} parent=11 // pred_fallthru
        _
    $region12: #{fsnet_loss.1} parent=5 // pred_fallthru
      _
    %p126 = scmp.lt.s32.totalorder %s9, 2
    // Predicated region
    $region17: #{fsnet_loss.1} parent=5 // pred_check
      %p127 = pneg %p126
    $region18: #{fsnet_loss.1} parent=5 // pred_check_branch
      %129 = sbr.rel (%p127) target = $region20
    $region19: #{fsnet_loss.1} parent=5 // pred_region
      // Predicated region
      $region21: #{fsnet_loss.1} parent=19 // pred_check
        %p130 = pneg %p29
      $region22: #{fsnet_loss.1} parent=19 // pred_check_branch
        %132 = sbr.rel (%p130) target = $region24
      $region23: #{fsnet_loss.1} parent=19 // pred_region
        %s133 = smul.u32 6, %s9
        %p134 = scmp.lt.s32.totalorder %s133, 11
        %s135 = scalar_select %p134, %s133, 11
        %s136 = smul.addr %s135, 4
        %s137 = smul.addr %s136, 4
        %s138 = scalar_lea.vmem %s0, %s137
        %s139 = smul.u32 6, %s9
      $region24: #{fsnet_loss.1} parent=19 // pred_fallthru
        _
      // Predicated region
      $region25: #{fsnet_loss.1} parent=19 // pred_check
        %p140 = pneg %p55
      $region26: #{fsnet_loss.1} parent=19 // pred_check_branch
        %142 = sbr.rel (%p140) target = $region28
      $region27: #{fsnet_loss.1} parent=19 // pred_region
        %s143 = smul.u32 6, %s9
        %p144 = scmp.lt.s32.totalorder %s143, 11
        %s145 = scalar_select %p144, %s143, 11
        %s146 = smul.addr %s145, 8
        %s147 = scalar_lea.vmem %s1, %s146
        %s148 = smul.u32 6, %s9
      $region28: #{fsnet_loss.1} parent=19 // pred_fallthru
        _
    $region20: #{fsnet_loss.1} parent=5 // pred_fallthru
      _
    %p149 = scmp.le.s32.totalorder 1, %s9
    %p150 = scmp.lt.s32.totalorder %s9, 3
    %p151 = pnand %p149, %p150
    %p152 = pneg %p151
    // Predicated region
    $region29: #{fsnet_loss.1} parent=5 // pred_check
      _
    $region30: #{fsnet_loss.1} parent=5 // pred_check_branch
      %154 = sbr.rel (%p151) target = $region32
    $region31: #{fsnet_loss.1} parent=5 // pred_region
      %s155 = ssub.s32 %s9, 1
      %s156 = smul.u32 6, %s14
      %p157 = scmp.lt.s32.totalorder %s156, 11
      %s158 = scalar_select %p157, %s156, 11
      %s159 = smul.addr %s158, 4
      %s160 = smul.addr %s159, 4
      %s161 = scalar_lea.vmem %s0, %s160
      %p162 = pneg %p35
      %p163 = pneg %p32
      %s164 = smul.u32 6, %s14
      %p165 = scmp.lt.s32.totalorder %s164, 11
      %s166 = scalar_select %p165, %s164, 11
      %s167 = smul.addr %s166, 8
      %s168 = scalar_lea.vmem %s1, %s167
      %p169 = pneg %p61
      %p170 = pneg %p58
      %p171 = pneg %p82
      %p172 = pneg %p79
      %p173 = pneg %p108
      %p174 = pneg %p105
      %p175 = scmp.lt.s32.totalorder %s14, 1
      %s176 = scalar_select %p175, %s14, 1
      %s177 = scalar_lea.vmem %s3, %s176
      %s178 = smul.u32 6, %s14
      %p179 = scmp.lt.s32.totalorder %s178, 11
      %s180 = scalar_select %p179, %s178, 11
      %s181 = smul.addr %s180, 4
      %s182 = smul.addr %s181, 4
      %s183 = scalar_lea.vmem %s0, %s182
      %s184 = smul.u32 6, %s14
      %s185 = smul.u32 6, %s14
      %p186 = scmp.lt.s32.totalorder %s185, 11
      %s187 = scalar_select %p186, %s185, 11
      %s188 = smul.addr %s187, 8
      %s189 = scalar_lea.vmem %s1, %s188
      %s190 = smul.u32 6, %s14
      %p191 = scmp.lt.s32.totalorder %s14, 1
      %s192 = scalar_select %p191, %s14, 1
      %s193 = scalar_lea.vmem %s3, %s192
      %v194 = vld [vmem:[%s183] sm:$0xff]
      %v195 = vld [vmem:[%s183 + $0x8] sm:$0xff]
      %v196 = vld [vmem:[%s183 + $0x10] sm:$0xff]
      %v197 = vld [vmem:[%s183 + $0x18] sm:$0xff]
      %v198 = vld [vmem:[%s183 + $0x20] sm:$0xff]
      %v199 = vld [vmem:[%s183 + $0x28] sm:$0xff]
      %v200 = vld [vmem:[%s183 + $0x30] sm:$0xff]
      %v201 = vld [vmem:[%s183 + $0x38] sm:$0xff]
      %v202 = vld [vmem:[%s183 + $0x40] sm:$0xff]
      %v203 = vld [vmem:[%s183 + $0x48] sm:$0xff]
      %v204 = vld [vmem:[%s183 + $0x50] sm:$0xff]
      %v205 = vld [vmem:[%s183 + $0x58] sm:$0xff]
      %v206 = vld [vmem:[%s2] sm:$0xff]
      %v207 = vld [vmem:[%s2 + $0x8] sm:$0xff]
      %v208 = vld [vmem:[%s2 + $0x10] sm:$0xff]
      %v209 = vld [vmem:[%s2 + $0x18] sm:$0xff]
      %v210 = vld [vmem:[%s2 + $0x20] sm:$0xff]
      %v211 = vld [vmem:[%s2 + $0x28] sm:$0xff]
      %v212 = vld [vmem:[%s2 + $0x30] sm:$0xff]
      %v213 = vld [vmem:[%s2 + $0x38] sm:$0xff]
      %v214 = vld [vmem:[%s2 + $0x40] sm:$0xff]
      %v215 = vld [vmem:[%s2 + $0x48] sm:$0xff]
      %v216 = vld [vmem:[%s2 + $0x50] sm:$0xff]
      %v217 = vld [vmem:[%s2 + $0x58] sm:$0xff]
      %v218 = vld [vmem:[%s2 + $0x60] sm:$0xff]
      %v219 = vld [vmem:[%s2 + $0x68] sm:$0xff]
      %v220 = vld [vmem:[%s2 + $0x70] sm:$0xff]
      %v221 = vld [vmem:[%s2 + $0x78] sm:$0xff]
      %v222 = vld [vmem:[%s2 + $0x80] sm:$0xff]
      %v223 = vld [vmem:[%s2 + $0x88] sm:$0xff]
      %v224 = vld [vmem:[%s2 + $0x90] sm:$0xff]
      %v225 = vld [vmem:[%s2 + $0x98] sm:$0xff]
      %v226 = vld [vmem:[%s2 + $0xa0] sm:$0xff]
      %v227 = vld [vmem:[%s2 + $0xa8] sm:$0xff]
      %v228 = vld [vmem:[%s2 + $0xb0] sm:$0xff]
      %v229 = vld [vmem:[%s2 + $0xb8] sm:$0xff]
      %v230 = vld [vmem:[%s2 + $0xc0] sm:$0xff]
      %v231 = vld [vmem:[%s2 + $0xc8] sm:$0xff]
      %v232 = vld [vmem:[%s2 + $0xd0] sm:$0xff]
      %v233 = vld [vmem:[%s2 + $0xd8] sm:$0xff]
      %v234 = vld [vmem:[%s2 + $0xe0] sm:$0xff]
      %v235 = vld [vmem:[%s2 + $0xe8] sm:$0xff]
      %v236 = vld [vmem:[%s2 + $0xf0] sm:$0xff]
      %v237 = vld [vmem:[%s2 + $0xf8] sm:$0xff]
      %v238 = vld [vmem:[%s2 + $0x100] sm:$0xff]
      %v239 = vld [vmem:[%s2 + $0x108] sm:$0xff]
      %v240 = vld [vmem:[%s2 + $0x110] sm:$0xff]
      %v241 = vld [vmem:[%s2 + $0x118] sm:$0xff]
      %v242 = vld [vmem:[%s2 + $0x120] sm:$0xff]
      %v243 = vld [vmem:[%s2 + $0x128] sm:$0xff]
      %v244 = vld [vmem:[%s2 + $0x130] sm:$0xff]
      %v245 = vld [vmem:[%s2 + $0x138] sm:$0xff]
      %v246 = vld [vmem:[%s2 + $0x140] sm:$0xff]
      %v247 = vld [vmem:[%s2 + $0x148] sm:$0xff]
      %v248 = vld [vmem:[%s2 + $0x150] sm:$0xff]
      %v249 = vld [vmem:[%s2 + $0x158] sm:$0xff]
      %v250 = vld [vmem:[%s2 + $0x160] sm:$0xff]
      %v251 = vld [vmem:[%s2 + $0x168] sm:$0xff]
      %v252 = vld [vmem:[%s2 + $0x170] sm:$0xff]
      %v253 = vld [vmem:[%s2 + $0x178] sm:$0xff]
      %v254 = vld [vmem:[%s2 + $0x180] sm:$0xff]
      %v255 = vld [vmem:[%s2 + $0x188] sm:$0xff]
      %v256 = vld [vmem:[%s2 + $0x190] sm:$0xff]
      %v257 = vld [vmem:[%s2 + $0x198] sm:$0xff]
      %v258 = vld [vmem:[%s2 + $0x1a0] sm:$0xff]
      %v259 = vld [vmem:[%s2 + $0x1a8] sm:$0xff]
      %v260 = vld [vmem:[%s2 + $0x1b0] sm:$0xff]
      %v261 = vld [vmem:[%s2 + $0x1b8] sm:$0xff]
      %v262 = vld [vmem:[%s2 + $0x1c0] sm:$0xff]
      %v263 = vld [vmem:[%s2 + $0x1c8] sm:$0xff]
      %v264 = vld [vmem:[%s2 + $0x1d0] sm:$0xff]
      %v265 = vld [vmem:[%s2 + $0x1d8] sm:$0xff]
      %v266 = vld [vmem:[%s2 + $0x1e0] sm:$0xff]
      %v267 = vld [vmem:[%s2 + $0x1e8] sm:$0xff]
      %v268 = vld [vmem:[%s2 + $0x1f0] sm:$0xff]
      %v269 = vld [vmem:[%s2 + $0x1f8] sm:$0xff]
      %v270 = vld [vmem:[%s2 + $0x200] sm:$0xff]
      %v271 = vld [vmem:[%s2 + $0x208] sm:$0xff]
      %v272 = vld [vmem:[%s2 + $0x210] sm:$0xff]
      %v273 = vld [vmem:[%s2 + $0x218] sm:$0xff]
      %v274 = vld [vmem:[%s2 + $0x220] sm:$0xff]
      %v275 = vld [vmem:[%s2 + $0x228] sm:$0xff]
      %v276 = vld [vmem:[%s2 + $0x230] sm:$0xff]
      %v277 = vld [vmem:[%s2 + $0x238] sm:$0xff]
      %v278 = vld [vmem:[%s2 + $0x240] sm:$0xff]
      %v279 = vld [vmem:[%s2 + $0x248] sm:$0xff]
      %v280 = vld [vmem:[%s2 + $0x250] sm:$0xff]
      %v281 = vld [vmem:[%s2 + $0x258] sm:$0xff]
      %v282 = vld [vmem:[%s2 + $0x260] sm:$0xff]
      %v283 = vld [vmem:[%s2 + $0x268] sm:$0xff]
      %v284 = vld [vmem:[%s2 + $0x270] sm:$0xff]
      %v285 = vld [vmem:[%s2 + $0x278] sm:$0xff]
      %v286 = vld [vmem:[%s2 + $0x280] sm:$0xff]
      %v287 = vld [vmem:[%s2 + $0x288] sm:$0xff]
      %v288 = vld [vmem:[%s2 + $0x290] sm:$0xff]
      %v289 = vld [vmem:[%s2 + $0x298] sm:$0xff]
      %v290 = vld [vmem:[%s2 + $0x2a0] sm:$0xff]
      %v291 = vld [vmem:[%s2 + $0x2a8] sm:$0xff]
      %v292 = vld [vmem:[%s2 + $0x2b0] sm:$0xff]
      %v293 = vld [vmem:[%s2 + $0x2b8] sm:$0xff]
      %v294 = vld [vmem:[%s2 + $0x2c0] sm:$0xff]
      %v295 = vld [vmem:[%s2 + $0x2c8] sm:$0xff]
      %v296 = vld [vmem:[%s2 + $0x2d0] sm:$0xff]
      %v297 = vld [vmem:[%s2 + $0x2d8] sm:$0xff]
      %v298 = vld [vmem:[%s2 + $0x2e0] sm:$0xff]
      %v299 = vld [vmem:[%s2 + $0x2e8] sm:$0xff]
      %v300 = vld [vmem:[%s2 + $0x2f0] sm:$0xff]
      %v301 = vld [vmem:[%s2 + $0x2f8] sm:$0xff]
      %v302 = vld [vmem:[%s2 + $0x300] sm:$0xff]
      %v303 = vld [vmem:[%s2 + $0x308] sm:$0xff]
      %v304 = vld [vmem:[%s2 + $0x310] sm:$0xff]
      %v305 = vld [vmem:[%s2 + $0x318] sm:$0xff]
      %v306 = vld [vmem:[%s2 + $0x320] sm:$0xff]
      %v307 = vld [vmem:[%s2 + $0x328] sm:$0xff]
      %v308 = vld [vmem:[%s2 + $0x330] sm:$0xff]
      %v309 = vld [vmem:[%s2 + $0x338] sm:$0xff]
      %v310 = vld [vmem:[%s2 + $0x340] sm:$0xff]
      %v311 = vld [vmem:[%s2 + $0x348] sm:$0xff]
      %v312 = vld [vmem:[%s2 + $0x350] sm:$0xff]
      %v313 = vld [vmem:[%s2 + $0x358] sm:$0xff]
      %v314 = vld [vmem:[%s2 + $0x360] sm:$0xff]
      %v315 = vld [vmem:[%s2 + $0x368] sm:$0xff]
      %v316 = vld [vmem:[%s2 + $0x370] sm:$0xff]
      %v317 = vld [vmem:[%s2 + $0x378] sm:$0xff]
      %v318 = vld [vmem:[%s2 + $0x380] sm:$0xff]
      %v319 = vld [vmem:[%s2 + $0x388] sm:$0xff]
      %v320 = vld [vmem:[%s2 + $0x390] sm:$0xff]
      %v321 = vld [vmem:[%s2 + $0x398] sm:$0xff]
      %v322 = vld [vmem:[%s2 + $0x3a0] sm:$0xff]
      %v323 = vld [vmem:[%s2 + $0x3a8] sm:$0xff]
      %v324 = vld [vmem:[%s2 + $0x3b0] sm:$0xff]
      %v325 = vld [vmem:[%s2 + $0x3b8] sm:$0xff]
      %v326 = vld [vmem:[%s2 + $0x3c0] sm:$0xff]
      %v327 = vld [vmem:[%s2 + $0x3c8] sm:$0xff]
      %v328 = vld [vmem:[%s2 + $0x3d0] sm:$0xff]
      %v329 = vld [vmem:[%s2 + $0x3d8] sm:$0xff]
      %v330 = vld [vmem:[%s2 + $0x3e0] sm:$0xff]
      %v331 = vld [vmem:[%s2 + $0x3e8] sm:$0xff]
      %v332 = vld [vmem:[%s2 + $0x3f0] sm:$0xff]
      %v333 = vld [vmem:[%s2 + $0x3f8] sm:$0xff]
      %v346 = vunpack.c.l.b16 %v194
      %v347 = vunpack.c.h.b16 %v194
      %v348 = vunpack.c.l.b16 %v195
      %v349 = vunpack.c.h.b16 %v195
      %v350 = vunpack.c.l.b16 %v196
      %v351 = vunpack.c.h.b16 %v196
      %v352 = vunpack.c.l.b16 %v197
      %v353 = vunpack.c.h.b16 %v197
      %v354 = vunpack.c.l.b16 %v198
      %v355 = vunpack.c.h.b16 %v198
      %v356 = vunpack.c.l.b16 %v199
      %v357 = vunpack.c.h.b16 %v199
      %v358 = vunpack.c.l.b16 %v200
      %v359 = vunpack.c.h.b16 %v200
      %v360 = vunpack.c.l.b16 %v201
      %v361 = vunpack.c.h.b16 %v201
      %v362 = vunpack.c.l.b16 %v202
      %v363 = vunpack.c.h.b16 %v202
      %v364 = vunpack.c.l.b16 %v203
      %v365 = vunpack.c.h.b16 %v203
      %v366 = vunpack.c.l.b16 %v204
      %v367 = vunpack.c.h.b16 %v204
      %v368 = vunpack.c.l.b16 %v205
      %v369 = vunpack.c.h.b16 %v205
      %v370 = vpack.c.b16 %v350, %v346
      %v371 = vpack.c.b16 %v351, %v347
      %v372 = vpack.c.b16 %v352, %v348
      %v373 = vpack.c.b16 %v353, %v349
      %v374 = vpack.c.b16 %v358, %v354
      %v375 = vpack.c.b16 %v359, %v355
      %v376 = vpack.c.b16 %v360, %v356
      %v377 = vpack.c.b16 %v361, %v357
      %v378 = vpack.c.b16 %v366, %v362
      %v379 = vpack.c.b16 %v367, %v363
      %v380 = vpack.c.b16 %v368, %v364
      %v381 = vpack.c.b16 %v369, %v365
      %v522 = vunpack.c.l.b16 %v206
      %v523 = vunpack.c.h.b16 %v206
      %v524 = vunpack.c.l.b16 %v207
      %v525 = vunpack.c.h.b16 %v207
      %v526 = vunpack.c.l.b16 %v208
      %v527 = vunpack.c.h.b16 %v208
      %v528 = vunpack.c.l.b16 %v209
      %v529 = vunpack.c.h.b16 %v209
      %v530 = vunpack.c.l.b16 %v210
      %v531 = vunpack.c.h.b16 %v210
      %v532 = vunpack.c.l.b16 %v211
      %v533 = vunpack.c.h.b16 %v211
      %v534 = vunpack.c.l.b16 %v212
      %v535 = vunpack.c.h.b16 %v212
      %v536 = vunpack.c.l.b16 %v213
      %v537 = vunpack.c.h.b16 %v213
      %v538 = vunpack.c.l.b16 %v214
      %v539 = vunpack.c.h.b16 %v214
      %v540 = vunpack.c.l.b16 %v215
      %v541 = vunpack.c.h.b16 %v215
      %v542 = vunpack.c.l.b16 %v216
      %v543 = vunpack.c.h.b16 %v216
      %v544 = vunpack.c.l.b16 %v217
      %v545 = vunpack.c.h.b16 %v217
      %v546 = vunpack.c.l.b16 %v218
      %v547 = vunpack.c.h.b16 %v218
      %v548 = vunpack.c.l.b16 %v219
      %v549 = vunpack.c.h.b16 %v219
      %v550 = vunpack.c.l.b16 %v220
      %v551 = vunpack.c.h.b16 %v220
      %v552 = vunpack.c.l.b16 %v221
      %v553 = vunpack.c.h.b16 %v221
      %v554 = vunpack.c.l.b16 %v222
      %v555 = vunpack.c.h.b16 %v222
      %v556 = vunpack.c.l.b16 %v223
      %v557 = vunpack.c.h.b16 %v223
      %v558 = vunpack.c.l.b16 %v224
      %v559 = vunpack.c.h.b16 %v224
      %v560 = vunpack.c.l.b16 %v225
      %v561 = vunpack.c.h.b16 %v225
      %v562 = vunpack.c.l.b16 %v226
      %v563 = vunpack.c.h.b16 %v226
      %v564 = vunpack.c.l.b16 %v227
      %v565 = vunpack.c.h.b16 %v227
      %v566 = vunpack.c.l.b16 %v228
      %v567 = vunpack.c.h.b16 %v228
      %v568 = vunpack.c.l.b16 %v229
      %v569 = vunpack.c.h.b16 %v229
      %v570 = vunpack.c.l.b16 %v230
      %v571 = vunpack.c.h.b16 %v230
      %v572 = vunpack.c.l.b16 %v231
      %v573 = vunpack.c.h.b16 %v231
      %v574 = vunpack.c.l.b16 %v232
      %v575 = vunpack.c.h.b16 %v232
      %v576 = vunpack.c.l.b16 %v233
      %v577 = vunpack.c.h.b16 %v233
      %v578 = vunpack.c.l.b16 %v234
      %v579 = vunpack.c.h.b16 %v234
      %v580 = vunpack.c.l.b16 %v235
      %v581 = vunpack.c.h.b16 %v235
      %v582 = vunpack.c.l.b16 %v236
      %v583 = vunpack.c.h.b16 %v236
      %v584 = vunpack.c.l.b16 %v237
      %v585 = vunpack.c.h.b16 %v237
      %v586 = vunpack.c.l.b16 %v238
      %v587 = vunpack.c.h.b16 %v238
      %v588 = vunpack.c.l.b16 %v239
      %v589 = vunpack.c.h.b16 %v239
      %v590 = vunpack.c.l.b16 %v240
      %v591 = vunpack.c.h.b16 %v240
      %v592 = vunpack.c.l.b16 %v241
      %v593 = vunpack.c.h.b16 %v241
      %v594 = vunpack.c.l.b16 %v242
      %v595 = vunpack.c.h.b16 %v242
      %v596 = vunpack.c.l.b16 %v243
      %v597 = vunpack.c.h.b16 %v243
      %v598 = vunpack.c.l.b16 %v244
      %v599 = vunpack.c.h.b16 %v244
      %v600 = vunpack.c.l.b16 %v245
      %v601 = vunpack.c.h.b16 %v245
      %v602 = vunpack.c.l.b16 %v246
      %v603 = vunpack.c.h.b16 %v246
      %v604 = vunpack.c.l.b16 %v247
      %v605 = vunpack.c.h.b16 %v247
      %v606 = vunpack.c.l.b16 %v248
      %v607 = vunpack.c.h.b16 %v248
      %v608 = vunpack.c.l.b16 %v249
      %v609 = vunpack.c.h.b16 %v249
      %v610 = vunpack.c.l.b16 %v250
      %v611 = vunpack.c.h.b16 %v250
      %v612 = vunpack.c.l.b16 %v251
      %v613 = vunpack.c.h.b16 %v251
      %v614 = vunpack.c.l.b16 %v252
      %v615 = vunpack.c.h.b16 %v252
      %v616 = vunpack.c.l.b16 %v253
      %v617 = vunpack.c.h.b16 %v253
      %v618 = vunpack.c.l.b16 %v254
      %v619 = vunpack.c.h.b16 %v254
      %v620 = vunpack.c.l.b16 %v255
      %v621 = vunpack.c.h.b16 %v255
      %v622 = vunpack.c.l.b16 %v256
      %v623 = vunpack.c.h.b16 %v256
      %v624 = vunpack.c.l.b16 %v257
      %v625 = vunpack.c.h.b16 %v257
      %v626 = vunpack.c.l.b16 %v258
      %v627 = vunpack.c.h.b16 %v258
      %v628 = vunpack.c.l.b16 %v259
      %v629 = vunpack.c.h.b16 %v259
      %v630 = vunpack.c.l.b16 %v260
      %v631 = vunpack.c.h.b16 %v260
      %v632 = vunpack.c.l.b16 %v261
      %v633 = vunpack.c.h.b16 %v261
      %v634 = vunpack.c.l.b16 %v262
      %v635 = vunpack.c.h.b16 %v262
      %v636 = vunpack.c.l.b16 %v263
      %v637 = vunpack.c.h.b16 %v263
      %v638 = vunpack.c.l.b16 %v264
      %v639 = vunpack.c.h.b16 %v264
      %v640 = vunpack.c.l.b16 %v265
      %v641 = vunpack.c.h.b16 %v265
      %v642 = vunpack.c.l.b16 %v266
      %v643 = vunpack.c.h.b16 %v266
      %v644 = vunpack.c.l.b16 %v267
      %v645 = vunpack.c.h.b16 %v267
      %v646 = vunpack.c.l.b16 %v268
      %v647 = vunpack.c.h.b16 %v268
      %v648 = vunpack.c.l.b16 %v269
      %v649 = vunpack.c.h.b16 %v269
      %v650 = vunpack.c.l.b16 %v270
      %v651 = vunpack.c.h.b16 %v270
      %v652 = vunpack.c.l.b16 %v271
      %v653 = vunpack.c.h.b16 %v271
      %v654 = vunpack.c.l.b16 %v272
      %v655 = vunpack.c.h.b16 %v272
      %v656 = vunpack.c.l.b16 %v273
      %v657 = vunpack.c.h.b16 %v273
      %v658 = vunpack.c.l.b16 %v274
      %v659 = vunpack.c.h.b16 %v274
      %v660 = vunpack.c.l.b16 %v275
      %v661 = vunpack.c.h.b16 %v275
      %v662 = vunpack.c.l.b16 %v276
      %v663 = vunpack.c.h.b16 %v276
      %v664 = vunpack.c.l.b16 %v277
      %v665 = vunpack.c.h.b16 %v277
      %v666 = vunpack.c.l.b16 %v278
      %v667 = vunpack.c.h.b16 %v278
      %v668 = vunpack.c.l.b16 %v279
      %v669 = vunpack.c.h.b16 %v279
      %v670 = vunpack.c.l.b16 %v280
      %v671 = vunpack.c.h.b16 %v280
      %v672 = vunpack.c.l.b16 %v281
      %v673 = vunpack.c.h.b16 %v281
      %v674 = vunpack.c.l.b16 %v282
      %v675 = vunpack.c.h.b16 %v282
      %v676 = vunpack.c.l.b16 %v283
      %v677 = vunpack.c.h.b16 %v283
      %v678 = vunpack.c.l.b16 %v284
      %v679 = vunpack.c.h.b16 %v284
      %v680 = vunpack.c.l.b16 %v285
      %v681 = vunpack.c.h.b16 %v285
      %v682 = vunpack.c.l.b16 %v286
      %v683 = vunpack.c.h.b16 %v286
      %v684 = vunpack.c.l.b16 %v287
      %v685 = vunpack.c.h.b16 %v287
      %v686 = vunpack.c.l.b16 %v288
      %v687 = vunpack.c.h.b16 %v288
      %v688 = vunpack.c.l.b16 %v289
      %v689 = vunpack.c.h.b16 %v289
      %v690 = vunpack.c.l.b16 %v290
      %v691 = vunpack.c.h.b16 %v290
      %v692 = vunpack.c.l.b16 %v291
      %v693 = vunpack.c.h.b16 %v291
      %v694 = vunpack.c.l.b16 %v292
      %v695 = vunpack.c.h.b16 %v292
      %v696 = vunpack.c.l.b16 %v293
      %v697 = vunpack.c.h.b16 %v293
      %v698 = vunpack.c.l.b16 %v294
      %v699 = vunpack.c.h.b16 %v294
      %v700 = vunpack.c.l.b16 %v295
      %v701 = vunpack.c.h.b16 %v295
      %v702 = vunpack.c.l.b16 %v296
      %v703 = vunpack.c.h.b16 %v296
      %v704 = vunpack.c.l.b16 %v297
      %v705 = vunpack.c.h.b16 %v297
      %v706 = vunpack.c.l.b16 %v298
      %v707 = vunpack.c.h.b16 %v298
      %v708 = vunpack.c.l.b16 %v299
      %v709 = vunpack.c.h.b16 %v299
      %v710 = vunpack.c.l.b16 %v300
      %v711 = vunpack.c.h.b16 %v300
      %v712 = vunpack.c.l.b16 %v301
      %v713 = vunpack.c.h.b16 %v301
      %v714 = vunpack.c.l.b16 %v302
      %v715 = vunpack.c.h.b16 %v302
      %v716 = vunpack.c.l.b16 %v303
      %v717 = vunpack.c.h.b16 %v303
      %v718 = vunpack.c.l.b16 %v304
      %v719 = vunpack.c.h.b16 %v304
      %v720 = vunpack.c.l.b16 %v305
      %v721 = vunpack.c.h.b16 %v305
      %v722 = vunpack.c.l.b16 %v306
      %v723 = vunpack.c.h.b16 %v306
      %v724 = vunpack.c.l.b16 %v307
      %v725 = vunpack.c.h.b16 %v307
      %v726 = vunpack.c.l.b16 %v308
      %v727 = vunpack.c.h.b16 %v308
      %v728 = vunpack.c.l.b16 %v309
      %v729 = vunpack.c.h.b16 %v309
      %v730 = vunpack.c.l.b16 %v310
      %v731 = vunpack.c.h.b16 %v310
      %v732 = vunpack.c.l.b16 %v311
      %v733 = vunpack.c.h.b16 %v311
      %v734 = vunpack.c.l.b16 %v312
      %v735 = vunpack.c.h.b16 %v312
      %v736 = vunpack.c.l.b16 %v313
      %v737 = vunpack.c.h.b16 %v313
      %v738 = vunpack.c.l.b16 %v314
      %v739 = vunpack.c.h.b16 %v314
      %v740 = vunpack.c.l.b16 %v315
      %v741 = vunpack.c.h.b16 %v315
      %v742 = vunpack.c.l.b16 %v316
      %v743 = vunpack.c.h.b16 %v316
      %v744 = vunpack.c.l.b16 %v317
      %v745 = vunpack.c.h.b16 %v317
      %v746 = vunpack.c.l.b16 %v318
      %v747 = vunpack.c.h.b16 %v318
      %v748 = vunpack.c.l.b16 %v319
      %v749 = vunpack.c.h.b16 %v319
      %v750 = vunpack.c.l.b16 %v320
      %v751 = vunpack.c.h.b16 %v320
      %v752 = vunpack.c.l.b16 %v321
      %v753 = vunpack.c.h.b16 %v321
      %v754 = vunpack.c.l.b16 %v322
      %v755 = vunpack.c.h.b16 %v322
      %v756 = vunpack.c.l.b16 %v323
      %v757 = vunpack.c.h.b16 %v323
      %v758 = vunpack.c.l.b16 %v324
      %v759 = vunpack.c.h.b16 %v324
      %v760 = vunpack.c.l.b16 %v325
      %v761 = vunpack.c.h.b16 %v325
      %v762 = vunpack.c.l.b16 %v326
      %v763 = vunpack.c.h.b16 %v326
      %v764 = vunpack.c.l.b16 %v327
      %v765 = vunpack.c.h.b16 %v327
      %v766 = vunpack.c.l.b16 %v328
      %v767 = vunpack.c.h.b16 %v328
      %v768 = vunpack.c.l.b16 %v329
      %v769 = vunpack.c.h.b16 %v329
      %v770 = vunpack.c.l.b16 %v330
      %v771 = vunpack.c.h.b16 %v330
      %v772 = vunpack.c.l.b16 %v331
      %v773 = vunpack.c.h.b16 %v331
      %v774 = vunpack.c.l.b16 %v332
      %v775 = vunpack.c.h.b16 %v332
      %v776 = vunpack.c.l.b16 %v333
      %v777 = vunpack.c.h.b16 %v333
      %v778 = vpack.c.b16 %v526, %v522
      %v779 = vpack.c.b16 %v527, %v523
      %v780 = vpack.c.b16 %v528, %v524
      %v781 = vpack.c.b16 %v529, %v525
      %v782 = vpack.c.b16 %v534, %v530
      %v783 = vpack.c.b16 %v535, %v531
      %v784 = vpack.c.b16 %v536, %v532
      %v785 = vpack.c.b16 %v537, %v533
      %v786 = vpack.c.b16 %v542, %v538
      %v787 = vpack.c.b16 %v543, %v539
      %v788 = vpack.c.b16 %v544, %v540
      %v789 = vpack.c.b16 %v545, %v541
      %v790 = vpack.c.b16 %v550, %v546
      %v791 = vpack.c.b16 %v551, %v547
      %v792 = vpack.c.b16 %v552, %v548
      %v793 = vpack.c.b16 %v553, %v549
      %v794 = vpack.c.b16 %v558, %v554
      %v795 = vpack.c.b16 %v559, %v555
      %v796 = vpack.c.b16 %v560, %v556
      %v797 = vpack.c.b16 %v561, %v557
      %v798 = vpack.c.b16 %v566, %v562
      %v799 = vpack.c.b16 %v567, %v563
      %v800 = vpack.c.b16 %v568, %v564
      %v801 = vpack.c.b16 %v569, %v565
      %v802 = vpack.c.b16 %v574, %v570
      %v803 = vpack.c.b16 %v575, %v571
      %v804 = vpack.c.b16 %v576, %v572
      %v805 = vpack.c.b16 %v577, %v573
      %v806 = vpack.c.b16 %v582, %v578
      %v807 = vpack.c.b16 %v583, %v579
      %v808 = vpack.c.b16 %v584, %v580
      %v809 = vpack.c.b16 %v585, %v581
      %v810 = vpack.c.b16 %v590, %v586
      %v811 = vpack.c.b16 %v591, %v587
      %v812 = vpack.c.b16 %v592, %v588
      %v813 = vpack.c.b16 %v593, %v589
      %v814 = vpack.c.b16 %v598, %v594
      %v815 = vpack.c.b16 %v599, %v595
      %v816 = vpack.c.b16 %v600, %v596
      %v817 = vpack.c.b16 %v601, %v597
      %v818 = vpack.c.b16 %v606, %v602
      %v819 = vpack.c.b16 %v607, %v603
      %v820 = vpack.c.b16 %v608, %v604
      %v821 = vpack.c.b16 %v609, %v605
      %v822 = vpack.c.b16 %v614, %v610
      %v823 = vpack.c.b16 %v615, %v611
      %v824 = vpack.c.b16 %v616, %v612
      %v825 = vpack.c.b16 %v617, %v613
      %v826 = vpack.c.b16 %v622, %v618
      %v827 = vpack.c.b16 %v623, %v619
      %v828 = vpack.c.b16 %v624, %v620
      %v829 = vpack.c.b16 %v625, %v621
      %v830 = vpack.c.b16 %v630, %v626
      %v831 = vpack.c.b16 %v631, %v627
      %v832 = vpack.c.b16 %v632, %v628
      %v833 = vpack.c.b16 %v633, %v629
      %v834 = vpack.c.b16 %v638, %v634
      %v835 = vpack.c.b16 %v639, %v635
      %v836 = vpack.c.b16 %v640, %v636
      %v837 = vpack.c.b16 %v641, %v637
      %v838 = vpack.c.b16 %v646, %v642
      %v839 = vpack.c.b16 %v647, %v643
      %v840 = vpack.c.b16 %v648, %v644
      %v841 = vpack.c.b16 %v649, %v645
      %v842 = vpack.c.b16 %v654, %v650
      %v843 = vpack.c.b16 %v655, %v651
      %v844 = vpack.c.b16 %v656, %v652
      %v845 = vpack.c.b16 %v657, %v653
      %v846 = vpack.c.b16 %v662, %v658
      %v847 = vpack.c.b16 %v663, %v659
      %v848 = vpack.c.b16 %v664, %v660
      %v849 = vpack.c.b16 %v665, %v661
      %v850 = vpack.c.b16 %v670, %v666
      %v851 = vpack.c.b16 %v671, %v667
      %v852 = vpack.c.b16 %v672, %v668
      %v853 = vpack.c.b16 %v673, %v669
      %v854 = vpack.c.b16 %v678, %v674
      %v855 = vpack.c.b16 %v679, %v675
      %v856 = vpack.c.b16 %v680, %v676
      %v857 = vpack.c.b16 %v681, %v677
      %v858 = vpack.c.b16 %v686, %v682
      %v859 = vpack.c.b16 %v687, %v683
      %v860 = vpack.c.b16 %v688, %v684
      %v861 = vpack.c.b16 %v689, %v685
      %v862 = vpack.c.b16 %v694, %v690
      %v863 = vpack.c.b16 %v695, %v691
      %v864 = vpack.c.b16 %v696, %v692
      %v865 = vpack.c.b16 %v697, %v693
      %v866 = vpack.c.b16 %v702, %v698
      %v867 = vpack.c.b16 %v703, %v699
      %v868 = vpack.c.b16 %v704, %v700
      %v869 = vpack.c.b16 %v705, %v701
      %v870 = vpack.c.b16 %v710, %v706
      %v871 = vpack.c.b16 %v711, %v707
      %v872 = vpack.c.b16 %v712, %v708
      %v873 = vpack.c.b16 %v713, %v709
      %v874 = vpack.c.b16 %v718, %v714
      %v875 = vpack.c.b16 %v719, %v715
      %v876 = vpack.c.b16 %v720, %v716
      %v877 = vpack.c.b16 %v721, %v717
      %v878 = vpack.c.b16 %v726, %v722
      %v879 = vpack.c.b16 %v727, %v723
      %v880 = vpack.c.b16 %v728, %v724
      %v881 = vpack.c.b16 %v729, %v725
      %v882 = vpack.c.b16 %v734, %v730
      %v883 = vpack.c.b16 %v735, %v731
      %v884 = vpack.c.b16 %v736, %v732
      %v885 = vpack.c.b16 %v737, %v733
      %v886 = vpack.c.b16 %v742, %v738
      %v887 = vpack.c.b16 %v743, %v739
      %v888 = vpack.c.b16 %v744, %v740
      %v889 = vpack.c.b16 %v745, %v741
      %v890 = vpack.c.b16 %v750, %v746
      %v891 = vpack.c.b16 %v751, %v747
      %v892 = vpack.c.b16 %v752, %v748
      %v893 = vpack.c.b16 %v753, %v749
      %v894 = vpack.c.b16 %v758, %v754
      %v895 = vpack.c.b16 %v759, %v755
      %v896 = vpack.c.b16 %v760, %v756
      %v897 = vpack.c.b16 %v761, %v757
      %v898 = vpack.c.b16 %v766, %v762
      %v899 = vpack.c.b16 %v767, %v763
      %v900 = vpack.c.b16 %v768, %v764
      %v901 = vpack.c.b16 %v769, %v765
      %v902 = vpack.c.b16 %v774, %v770
      %v903 = vpack.c.b16 %v775, %v771
      %v904 = vpack.c.b16 %v776, %v772
      %v905 = vpack.c.b16 %v777, %v773
      %1034 = vmatprep.subr.bf16.mxu0 %v807
      %1035 = vmatpush1.bf16.msra.mxu0 %v806
      %1036 = vmatprep.subr.bf16.mxu0 %v803
      %1037 = vmatpush1.bf16.msra.mxu0 %v802
      %1038 = vmatprep.subr.bf16.mxu0 %v799
      %1039 = vmatpush1.bf16.msra.mxu0 %v798
      %1040 = vmatprep.subr.bf16.mxu0 %v795
      %1041 = vmatpush1.bf16.msra.mxu0 %v794
      %1042 = vmatprep.subr.bf16.mxu0 %v791
      %1043 = vmatpush1.bf16.msra.mxu0 %v790
      %1044 = vmatprep.subr.bf16.mxu0 %v787
      %1045 = vmatpush1.bf16.msra.mxu0 %v786
      %1046 = vmatprep.subr.bf16.mxu0 %v783
      %1047 = vmatpush1.bf16.msra.mxu0 %v782
      %1048 = vmatprep.subr.bf16.mxu0 %v779
      %1049 = vmatpush1.bf16.msra.mxu0 %v778
      %1050 = vmatprep.subr.bf16.mxu0 %v839
      %1051 = vmatpush2.bf16.msra.mxu0 %v838
      %1052 = vmatprep.subr.bf16.mxu0 %v835
      %1053 = vmatpush2.bf16.msra.mxu0 %v834
      %1054 = vmatprep.subr.bf16.mxu0 %v831
      %1055 = vmatpush2.bf16.msra.mxu0 %v830
      %1056 = vmatprep.subr.bf16.mxu0 %v827
      %1057 = vmatpush2.bf16.msra.mxu0 %v826
      %1058 = vmatprep.subr.bf16.mxu0 %v823
      %1059 = vmatpush2.bf16.msra.mxu0 %v822
      %1060 = vmatprep.subr.bf16.mxu0 %v819
      %1061 = vmatpush2.bf16.msra.mxu0 %v818
      %1062 = vmatprep.subr.bf16.mxu0 %v815
      %1063 = vmatpush2.bf16.msra.mxu0 %v814
      %1064 = vmatprep.subr.bf16.mxu0 %v811
      %1065 = vmatpush2.bf16.msra.mxu0 %v810
      %1066 = vmatprep.mubr.bf16.mxu0 %v371
      %1067 = vmatmul.mubr.bf16.gmra.mxu0 %v370
      %v1068 = vpop.f32.mrf.mxu0
      %v1069 = vadd.f32 0.0, %v1068
      %v1070 = vpop.f32.mrf.mxu0
      %v1071 = vadd.f32 0.0, %v1070
      %v1072 = vpop.f32.mrf.mxu0
      %v1073 = vadd.f32 0.0, %v1072
      %v1074 = vpop.f32.mrf.mxu0
      %v1075 = vadd.f32 0.0, %v1074
      %1076 = vmatprep.mubr.bf16.mxu0 %v375
      %1077 = vmatmul.mubr.bf16.gmra.mxu0 %v374
      %v1078 = vpop.f32.mrf.mxu0
      %v1079 = vadd.f32 0.0, %v1078
      %v1080 = vpop.f32.mrf.mxu0
      %v1081 = vadd.f32 0.0, %v1080
      %v1082 = vpop.f32.mrf.mxu0
      %v1083 = vadd.f32 0.0, %v1082
      %v1084 = vpop.f32.mrf.mxu0
      %v1085 = vadd.f32 0.0, %v1084
      %1086 = vmatprep.mubr.bf16.mxu0 %v379
      %1087 = vmatmul.mubr.bf16.gmra.mxu0 %v378
      %v1088 = vpop.f32.mrf.mxu0
      %v1089 = vadd.f32 0.0, %v1088
      %v1090 = vpop.f32.mrf.mxu0
      %v1091 = vadd.f32 0.0, %v1090
      %v1092 = vpop.f32.mrf.mxu0
      %v1093 = vadd.f32 0.0, %v1092
      %v1094 = vpop.f32.mrf.mxu0
      %v1095 = vadd.f32 0.0, %v1094
      %1096 = vdwg.mxu0
      %1097 = vmatprep.subr.bf16.mxu0 %v871
      %1098 = vmatpush1.bf16.msra.mxu0 %v870
      %1099 = vmatprep.subr.bf16.mxu0 %v867
      %1100 = vmatpush1.bf16.msra.mxu0 %v866
      %1101 = vmatprep.subr.bf16.mxu0 %v863
      %1102 = vmatpush1.bf16.msra.mxu0 %v862
      %1103 = vmatprep.subr.bf16.mxu0 %v859
      %1104 = vmatpush1.bf16.msra.mxu0 %v858
      %1105 = vmatprep.subr.bf16.mxu0 %v855
      %1106 = vmatpush1.bf16.msra.mxu0 %v854
      %1107 = vmatprep.subr.bf16.mxu0 %v851
      %1108 = vmatpush1.bf16.msra.mxu0 %v850
      %1109 = vmatprep.subr.bf16.mxu0 %v847
      %1110 = vmatpush1.bf16.msra.mxu0 %v846
      %1111 = vmatprep.subr.bf16.mxu0 %v843
      %1112 = vmatpush1.bf16.msra.mxu0 %v842
      %1113 = vmatprep.subr.bf16.mxu0 %v903
      %1114 = vmatpush2.bf16.msra.mxu0 %v902
      %1115 = vmatprep.subr.bf16.mxu0 %v899
      %1116 = vmatpush2.bf16.msra.mxu0 %v898
      %1117 = vmatprep.subr.bf16.mxu0 %v895
      %1118 = vmatpush2.bf16.msra.mxu0 %v894
      %1119 = vmatprep.subr.bf16.mxu0 %v891
      %1120 = vmatpush2.bf16.msra.mxu0 %v890
      %1121 = vmatprep.subr.bf16.mxu0 %v887
      %1122 = vmatpush2.bf16.msra.mxu0 %v886
      %1123 = vmatprep.subr.bf16.mxu0 %v883
      %1124 = vmatpush2.bf16.msra.mxu0 %v882
      %1125 = vmatprep.subr.bf16.mxu0 %v879
      %1126 = vmatpush2.bf16.msra.mxu0 %v878
      %1127 = vmatprep.subr.bf16.mxu0 %v875
      %1128 = vmatpush2.bf16.msra.mxu0 %v874
      %1129 = vmatprep.mubr.bf16.mxu0 %v373
      %1130 = vmatmul.mubr.bf16.gmra.mxu0 %v372
      %v1131 = vpop.f32.mrf.mxu0
      %v1132 = vadd.f32 %v1069, %v1131
      %v1133 = vpop.f32.mrf.mxu0
      %v1134 = vadd.f32 %v1071, %v1133
      %v1135 = vpop.f32.mrf.mxu0
      %v1136 = vadd.f32 %v1073, %v1135
      %v1137 = vpop.f32.mrf.mxu0
      %v1138 = vadd.f32 %v1075, %v1137
      %1139 = vmatprep.mubr.bf16.mxu0 %v377
      %1140 = vmatmul.mubr.bf16.gmra.mxu0 %v376
      %v1141 = vpop.f32.mrf.mxu0
      %v1142 = vadd.f32 %v1079, %v1141
      %v1143 = vpop.f32.mrf.mxu0
      %v1144 = vadd.f32 %v1081, %v1143
      %v1145 = vpop.f32.mrf.mxu0
      %v1146 = vadd.f32 %v1083, %v1145
      %v1147 = vpop.f32.mrf.mxu0
      %v1148 = vadd.f32 %v1085, %v1147
      %1149 = vmatprep.mubr.bf16.mxu0 %v381
      %1150 = vmatmul.mubr.bf16.gmra.mxu0 %v380
      %v1151 = vpop.f32.mrf.mxu0
      %v1152 = vadd.f32 %v1089, %v1151
      %v1153 = vpop.f32.mrf.mxu0
      %v1154 = vadd.f32 %v1091, %v1153
      %v1155 = vpop.f32.mrf.mxu0
      %v1156 = vadd.f32 %v1093, %v1155
      %v1157 = vpop.f32.mrf.mxu0
      %v1158 = vadd.f32 %v1095, %v1157
      %1159 = vdwg.mxu0
      %1160 = vmatprep.subr.bf16.mxu0 %v809
      %1161 = vmatpush1.bf16.msra.mxu0 %v808
      %1162 = vmatprep.subr.bf16.mxu0 %v805
      %1163 = vmatpush1.bf16.msra.mxu0 %v804
      %1164 = vmatprep.subr.bf16.mxu0 %v801
      %1165 = vmatpush1.bf16.msra.mxu0 %v800
      %1166 = vmatprep.subr.bf16.mxu0 %v797
      %1167 = vmatpush1.bf16.msra.mxu0 %v796
      %1168 = vmatprep.subr.bf16.mxu0 %v793
      %1169 = vmatpush1.bf16.msra.mxu0 %v792
      %1170 = vmatprep.subr.bf16.mxu0 %v789
      %1171 = vmatpush1.bf16.msra.mxu0 %v788
      %1172 = vmatprep.subr.bf16.mxu0 %v785
      %1173 = vmatpush1.bf16.msra.mxu0 %v784
      %1174 = vmatprep.subr.bf16.mxu0 %v781
      %1175 = vmatpush1.bf16.msra.mxu0 %v780
      %1176 = vmatprep.subr.bf16.mxu0 %v841
      %1177 = vmatpush2.bf16.msra.mxu0 %v840
      %1178 = vmatprep.subr.bf16.mxu0 %v837
      %1179 = vmatpush2.bf16.msra.mxu0 %v836
      %1180 = vmatprep.subr.bf16.mxu0 %v833
      %1181 = vmatpush2.bf16.msra.mxu0 %v832
      %1182 = vmatprep.subr.bf16.mxu0 %v829
      %1183 = vmatpush2.bf16.msra.mxu0 %v828
      %1184 = vmatprep.subr.bf16.mxu0 %v825
      %1185 = vmatpush2.bf16.msra.mxu0 %v824
      %1186 = vmatprep.subr.bf16.mxu0 %v821
      %1187 = vmatpush2.bf16.msra.mxu0 %v820
      %1188 = vmatprep.subr.bf16.mxu0 %v817
      %1189 = vmatpush2.bf16.msra.mxu0 %v816
      %1190 = vmatprep.subr.bf16.mxu0 %v813
      %1191 = vmatpush2.bf16.msra.mxu0 %v812
      %1192 = vmatprep.mubr.bf16.mxu0 %v371
      %1193 = vmatmul.mubr.bf16.gmra.mxu0 %v370
      %v1194 = vpop.f32.mrf.mxu0
      %v1195 = vadd.f32 0.0, %v1194
      %v1196 = vpop.f32.mrf.mxu0
      %v1197 = vadd.f32 0.0, %v1196
      %v1198 = vpop.f32.mrf.mxu0
      %v1199 = vadd.f32 0.0, %v1198
      %v1200 = vpop.f32.mrf.mxu0
      %v1201 = vadd.f32 0.0, %v1200
      %1202 = vmatprep.mubr.bf16.mxu0 %v375
      %1203 = vmatmul.mubr.bf16.gmra.mxu0 %v374
      %v1204 = vpop.f32.mrf.mxu0
      %v1205 = vadd.f32 0.0, %v1204
      %v1206 = vpop.f32.mrf.mxu0
      %v1207 = vadd.f32 0.0, %v1206
      %v1208 = vpop.f32.mrf.mxu0
      %v1209 = vadd.f32 0.0, %v1208
      %v1210 = vpop.f32.mrf.mxu0
      %v1211 = vadd.f32 0.0, %v1210
      %1212 = vmatprep.mubr.bf16.mxu0 %v379
      %1213 = vmatmul.mubr.bf16.gmra.mxu0 %v378
      %v1214 = vpop.f32.mrf.mxu0
      %v1215 = vadd.f32 0.0, %v1214
      %v1216 = vpop.f32.mrf.mxu0
      %v1217 = vadd.f32 0.0, %v1216
      %v1218 = vpop.f32.mrf.mxu0
      %v1219 = vadd.f32 0.0, %v1218
      %v1220 = vpop.f32.mrf.mxu0
      %v1221 = vadd.f32 0.0, %v1220
      %1222 = vdwg.mxu0
      %1223 = vmatprep.subr.bf16.mxu0 %v873
      %1224 = vmatpush1.bf16.msra.mxu0 %v872
      %1225 = vmatprep.subr.bf16.mxu0 %v869
      %1226 = vmatpush1.bf16.msra.mxu0 %v868
      %1227 = vmatprep.subr.bf16.mxu0 %v865
      %1228 = vmatpush1.bf16.msra.mxu0 %v864
      %1229 = vmatprep.subr.bf16.mxu0 %v861
      %1230 = vmatpush1.bf16.msra.mxu0 %v860
      %1231 = vmatprep.subr.bf16.mxu0 %v857
      %1232 = vmatpush1.bf16.msra.mxu0 %v856
      %1233 = vmatprep.subr.bf16.mxu0 %v853
      %1234 = vmatpush1.bf16.msra.mxu0 %v852
      %1235 = vmatprep.subr.bf16.mxu0 %v849
      %1236 = vmatpush1.bf16.msra.mxu0 %v848
      %1237 = vmatprep.subr.bf16.mxu0 %v845
      %1238 = vmatpush1.bf16.msra.mxu0 %v844
      %1239 = vmatprep.subr.bf16.mxu0 %v905
      %1240 = vmatpush2.bf16.msra.mxu0 %v904
      %1241 = vmatprep.subr.bf16.mxu0 %v901
      %1242 = vmatpush2.bf16.msra.mxu0 %v900
      %1243 = vmatprep.subr.bf16.mxu0 %v897
      %1244 = vmatpush2.bf16.msra.mxu0 %v896
      %1245 = vmatprep.subr.bf16.mxu0 %v893
      %1246 = vmatpush2.bf16.msra.mxu0 %v892
      %1247 = vmatprep.subr.bf16.mxu0 %v889
      %1248 = vmatpush2.bf16.msra.mxu0 %v888
      %1249 = vmatprep.subr.bf16.mxu0 %v885
      %1250 = vmatpush2.bf16.msra.mxu0 %v884
      %1251 = vmatprep.subr.bf16.mxu0 %v881
      %1252 = vmatpush2.bf16.msra.mxu0 %v880
      %1253 = vmatprep.subr.bf16.mxu0 %v877
      %1254 = vmatpush2.bf16.msra.mxu0 %v876
      %1255 = vmatprep.mubr.bf16.mxu0 %v373
      %1256 = vmatmul.mubr.bf16.gmra.mxu0 %v372
      %v1257 = vpop.f32.mrf.mxu0
      %v1258 = vadd.f32 %v1195, %v1257
      %v1259 = vpop.f32.mrf.mxu0
      %v1260 = vadd.f32 %v1197, %v1259
      %v1261 = vpop.f32.mrf.mxu0
      %v1262 = vadd.f32 %v1199, %v1261
      %v1263 = vpop.f32.mrf.mxu0
      %v1264 = vadd.f32 %v1201, %v1263
      %1265 = vmatprep.mubr.bf16.mxu0 %v377
      %1266 = vmatmul.mubr.bf16.gmra.mxu0 %v376
      %v1267 = vpop.f32.mrf.mxu0
      %v1268 = vadd.f32 %v1205, %v1267
      %v1269 = vpop.f32.mrf.mxu0
      %v1270 = vadd.f32 %v1207, %v1269
      %v1271 = vpop.f32.mrf.mxu0
      %v1272 = vadd.f32 %v1209, %v1271
      %v1273 = vpop.f32.mrf.mxu0
      %v1274 = vadd.f32 %v1211, %v1273
      %1275 = vmatprep.mubr.bf16.mxu0 %v381
      %1276 = vmatmul.mubr.bf16.gmra.mxu0 %v380
      %v1277 = vpop.f32.mrf.mxu0
      %v1278 = vadd.f32 %v1215, %v1277
      %v1279 = vpop.f32.mrf.mxu0
      %v1280 = vadd.f32 %v1217, %v1279
      %v1281 = vpop.f32.mrf.mxu0
      %v1282 = vadd.f32 %v1219, %v1281
      %v1283 = vpop.f32.mrf.mxu0
      %v1284 = vadd.f32 %v1221, %v1283
      %1285 = vdwg.mxu0
      %v1286 = vand.u32 2147483647, %v1132
      %v1287 = vand.u32 2147483647, %v1134
      %v1288 = vand.u32 2147483647, %v1258
      %v1289 = vand.u32 2147483647, %v1260
      %v1290 = vand.u32 2147483647, %v1136
      %v1291 = vand.u32 2147483647, %v1138
      %v1292 = vand.u32 2147483647, %v1262
      %v1293 = vand.u32 2147483647, %v1264
      %v1294 = vand.u32 2147483647, %v1142
      %v1295 = vand.u32 2147483647, %v1144
      %v1296 = vand.u32 2147483647, %v1268
      %v1297 = vand.u32 2147483647, %v1270
      %v1298 = vand.u32 2147483647, %v1146
      %v1299 = vand.u32 2147483647, %v1148
      %v1300 = vand.u32 2147483647, %v1272
      %v1301 = vand.u32 2147483647, %v1274
      %v1302 = vand.u32 2147483647, %v1152
      %v1303 = vand.u32 2147483647, %v1154
      %v1304 = vand.u32 2147483647, %v1278
      %v1305 = vand.u32 2147483647, %v1280
      %v1306 = vand.u32 2147483647, %v1156
      %v1307 = vand.u32 2147483647, %v1158
      %v1308 = vand.u32 2147483647, %v1282
      %v1309 = vand.u32 2147483647, %v1284
      %v1310 = vld [vmem:[%s189] sm:$0xff]
      %v1311 = vld [vmem:[%s189 + $0x8] sm:$0xff]
      %v1312 = vld [vmem:[%s189 + $0x10] sm:$0xff]
      %v1313 = vld [vmem:[%s189 + $0x18] sm:$0xff]
      %v1314 = vld [vmem:[%s189 + $0x20] sm:$0xff]
      %v1315 = vld [vmem:[%s189 + $0x28] sm:$0xff]
      %1317 = vset.pattern.permute.xlu0 0
      %1318 = vperm.xlu0 %1317, %v1310
      %v1319 = vpop.permute.xlu0 %1318
      %1322 = vset.pattern.permute.xlu0 0
      %1323 = vperm.xlu0 %1322, %v1311
      %v1324 = vpop.permute.xlu0 %1323
      %1327 = vset.pattern.permute.xlu0 0
      %1328 = vperm.xlu0 %1327, %v1312
      %v1329 = vpop.permute.xlu0 %1328
      %1332 = vset.pattern.permute.xlu0 0
      %1333 = vperm.xlu0 %1332, %v1313
      %v1334 = vpop.permute.xlu0 %1333
      %1337 = vset.pattern.permute.xlu0 0
      %1338 = vperm.xlu0 %1337, %v1314
      %v1339 = vpop.permute.xlu0 %1338
      %1342 = vset.pattern.permute.xlu0 0
      %1343 = vperm.xlu0 %1342, %v1315
      %v1344 = vpop.permute.xlu0 %1343
      %v1346 = vmul.f32 %v1286, %v1319
      %v1347 = vmul.f32 %v1287, %v1319
      %v1348 = vmul.f32 %v1288, %v1319
      %v1349 = vmul.f32 %v1289, %v1319
      %v1350 = vmul.f32 %v1290, %v1324
      %v1351 = vmul.f32 %v1291, %v1324
      %v1352 = vmul.f32 %v1292, %v1324
      %v1353 = vmul.f32 %v1293, %v1324
      %v1354 = vmul.f32 %v1294, %v1329
      %v1355 = vmul.f32 %v1295, %v1329
      %v1356 = vmul.f32 %v1296, %v1329
      %v1357 = vmul.f32 %v1297, %v1329
      %v1358 = vmul.f32 %v1298, %v1334
      %v1359 = vmul.f32 %v1299, %v1334
      %v1360 = vmul.f32 %v1300, %v1334
      %v1361 = vmul.f32 %v1301, %v1334
      %v1362 = vmul.f32 %v1302, %v1339
      %v1363 = vmul.f32 %v1303, %v1339
      %v1364 = vmul.f32 %v1304, %v1339
      %v1365 = vmul.f32 %v1305, %v1339
      %v1366 = vmul.f32 %v1306, %v1344
      %v1367 = vmul.f32 %v1307, %v1344
      %v1368 = vmul.f32 %v1308, %v1344
      %v1369 = vmul.f32 %v1309, %v1344
      %v1370 = vadd.f32 %v1346, %v1347
      %v1371 = vadd.f32 %v1370, %v1348
      %v1372 = vadd.f32 %v1371, %v1349
      %v1373 = vadd.f32 %v1372, %v1350
      %v1374 = vadd.f32 %v1373, %v1351
      %v1375 = vadd.f32 %v1374, %v1352
      %v1376 = vadd.f32 %v1375, %v1353
      %v1377 = vadd.f32 %v1376, %v1354
      %v1378 = vadd.f32 %v1377, %v1355
      %v1379 = vadd.f32 %v1378, %v1356
      %v1380 = vadd.f32 %v1379, %v1357
      %v1381 = vadd.f32 %v1380, %v1358
      %v1382 = vadd.f32 %v1381, %v1359
      %v1383 = vadd.f32 %v1382, %v1360
      %v1384 = vadd.f32 %v1383, %v1361
      %v1385 = vadd.f32 %v1384, %v1362
      %v1386 = vadd.f32 %v1385, %v1363
      %v1387 = vadd.f32 %v1386, %v1364
      %v1388 = vadd.f32 %v1387, %v1365
      %v1389 = vadd.f32 %v1388, %v1366
      %v1390 = vadd.f32 %v1389, %v1367
      %v1391 = vadd.f32 %v1390, %v1368
      %v1392 = vadd.f32 %v1391, %v1369
      %1393 = vadd.xlane.f32.xlu0 %v1392
      %v1394 = vpop.xlane.xlu0 %1393
      %v1395 = vrot.slane %v1394, 4
      %v1396 = vadd.f32 %v1394, %v1395
      %v1397 = vrot.slane %v1396, 2
      %v1398 = vadd.f32 %v1396, %v1397
      %v1399 = vrot.slane %v1398, 1
      %v1400 = vadd.f32 %v1398, %v1399
      %s1401 = vtos %v1400
      %v1402 = vstv %s1401
      %1403 = vst [vmem:[%s193] sm:$0x1] %v1402
      %p1404 = scmp.lt.s32.totalorder %s14, 1
      %s1405 = scalar_select %p1404, %s14, 1
      %s1406 = scalar_lea.vmem %s3, %s1405
      // Predicated region
      $region33: #{fsnet_loss.1} parent=31 // pred_check
        %p1407 = pneg %p105
      $region34: #{fsnet_loss.1} parent=31 // pred_check_branch
        %1409 = sbr.rel (%p1407) target = $region36
      $region35: #{fsnet_loss.1} parent=31 // pred_region
        _
      $region36: #{fsnet_loss.1} parent=31 // pred_fallthru
        _
    $region32: #{fsnet_loss.1} parent=5 // pred_fallthru
      _
    %p1410 = scmp.le.s32.totalorder 2, %s9
    // Predicated region
    $region37: #{fsnet_loss.1} parent=5 // pred_check
      %p1411 = pneg %p1410
    $region38: #{fsnet_loss.1} parent=5 // pred_check_branch
      %1413 = sbr.rel (%p1411) target = $region40
    $region39: #{fsnet_loss.1} parent=5 // pred_region
      %s1414 = ssub.s32 %s9, 2
      // Predicated region
      $region41: #{fsnet_loss.1} parent=39 // pred_check
        %p1415 = pneg %p111
      $region42: #{fsnet_loss.1} parent=39 // pred_check_branch
        %1417 = sbr.rel (%p1415) target = $region44
      $region43: #{fsnet_loss.1} parent=39 // pred_region
        %p1418 = scmp.lt.s32.totalorder %s15, 1
        %s1419 = scalar_select %p1418, %s15, 1
        %s1420 = scalar_lea.vmem %s3, %s1419
      $region44: #{fsnet_loss.1} parent=39 // pred_fallthru
        _
    $region40: #{fsnet_loss.1} parent=5 // pred_fallthru
      _
  $region6: #{fsnet_loss.1} parent=0 // loop_footer
    %s13 = sadd.s32 1, %s9
  $region7: #{fsnet_loss.1} parent=0 // loop_footer_branch
    %8 = sbr.rel target = $region3
  $region8: #{fsnet_loss.1} parent=0 // loop_exit
    _

</llo_original>
